<compile_context>
chip_gen: v7x
topology: tpu7x:2x2x1
jax: 0.10.0
libtpu: 0.0.40
codegen_flags: <defaults>
</compile_context>

<pallas_src>
from functools import partial

import jax
import jax.numpy as jnp
from jax.experimental import pallas as pl
from jax.experimental.pallas import tpu as pltpu


def _round_up(x, m):
    return (x + m - 1) // m * m


def _conv_stats_kernel(a_ref, w_ref, conv_ref, sum_ref, sumsq_ref):
    """Phase 1: conv-as-matmul tile + per-tile BN partial sums.

    a_ref     : (Kpad, tm)      bf16  im2col patch columns for this tile
    w_ref     : (Cout_p, Kpad)  bf16  reshaped conv weights (VMEM-resident)
    conv_ref  : (Cout_p, tm)    f32   conv output tile (lane-dense)
    sum_ref   : (1, Cout_p, 1)  f32   per-tile per-channel sum
    sumsq_ref : (1, Cout_p, 1)  f32   per-tile per-channel sum of squares
    """
    conv = jnp.dot(w_ref[...], a_ref[...], preferred_element_type=jnp.float32)
    conv_ref[...] = conv
    sum_ref[0] = jnp.sum(conv, axis=-1, keepdims=True)           # (Cout_p, 1)
    sumsq_ref[0] = jnp.sum(conv * conv, axis=-1, keepdims=True)  # (Cout_p, 1)


def _bn_relu_kernel(conv_ref, scale_ref, shift_ref, o_ref):
    """Phase 2: y = relu(conv * scale + shift), elementwise in f32."""
    y = conv_ref[...] * scale_ref[...] + shift_ref[...]
    o_ref[...] = jnp.maximum(y, 0.0).astype(o_ref.dtype)


@partial(jax.jit, static_argnames=("stride", "tm"))
def convolution_forward(x_nchw, weight, gamma, beta, *, stride=1, tm=512):
    """Forward of Convolution(convSize=K, Cin, Cout, stride, batchNorm=True)."""
    N, Cin, H, W = x_nchw.shape
    Cout, _, K, _ = weight.shape
    pad = (K - 1) // 2
    H_out = (H + 2 * pad - K) // stride + 1
    W_out = (W + 2 * pad - K) // stride + 1

    M = N * H_out * W_out
    Kdim = K * K * Cin
    Kpad = _round_up(Kdim, 8)          # sublane-aligned contraction depth
    Cout_p = _round_up(Cout, 8)        # sublane-aligned channel count

    # Clamp the lane-tile to what the problem actually needs, keep it 128-aligned.
    tm = max(128, min(_round_up(tm, 128), _round_up(M, 128)))
    n_tiles = pl.cdiv(M, tm)
    Mp = n_tiles * tm

    # ---- glue (fused under this jit): transposed bf16 im2col (Kpad, Mp) ----
    xp = jnp.pad(x_nchw, ((0, 0), (0, 0), (pad, pad), (pad, pad)))
    cols = []
    for kh in range(K):
        for kw in range(K):
            slab = xp[:, :, kh:kh + stride * (H_out - 1) + 1:stride,
                            kw:kw + stride * (W_out - 1) + 1:stride]
            cols.append(jnp.transpose(slab, (1, 0, 2, 3)).reshape(Cin, M))
    a = jnp.concatenate(cols, axis=0)                               # (Kdim, M)
    a = jnp.pad(a, ((0, Kpad - Kdim), (0, Mp - M))).astype(jnp.bfloat16)

    # PyTorch (Cout, Cin, Kh, Kw) -> (Cout, Kh*Kw*Cin), matching patch row order.
    w2 = jnp.transpose(weight, (0, 2, 3, 1)).reshape(Cout, Kdim)
    w2 = jnp.pad(w2, ((0, Cout_p - Cout), (0, Kpad - Kdim))).astype(jnp.bfloat16)

    cparams = pltpu.CompilerParams(
        dimension_semantics=("parallel",),        # v7x: shard M-tiles over both TCs
        vmem_limit_bytes=32 * 1024 * 1024)        # within scoped VMEM on v5e/v6e/v7x

    # ---- phase 1: conv tiles + per-tile BN partial sums ----
    conv_flat, sums, sumsqs = pl.pallas_call(
        _conv_stats_kernel,
        out_shape=(jax.ShapeDtypeStruct((Cout_p, Mp), jnp.float32),
                   jax.ShapeDtypeStruct((n_tiles, Cout_p, 1), jnp.float32),
                   jax.ShapeDtypeStruct((n_tiles, Cout_p, 1), jnp.float32)),
        grid_spec=pltpu.PrefetchScalarGridSpec(
            num_scalar_prefetch=0,
            grid=(n_tiles,),
            in_specs=[
                pl.BlockSpec((Kpad, tm), lambda i: (0, i)),
                pl.BlockSpec((Cout_p, Kpad), lambda i: (0, 0)),
            ],
            out_specs=(
                pl.BlockSpec((Cout_p, tm), lambda i: (0, i)),
                pl.BlockSpec((1, Cout_p, 1), lambda i: (i, 0, 0)),
                pl.BlockSpec((1, Cout_p, 1), lambda i: (i, 0, 0)),
            ),
        ),
        compiler_params=cparams,
    )(a, w2)

    # ---- BN finalize: O(Cout) work, fused into the jit ----
    # Padded columns of `a` are all-zero => conv == 0 there => they contribute 0 to
    # both partial sums, so dividing by the true element count M is exact.
    count = float(M)
    mean = jnp.sum(sums, axis=0)[:, 0] / count                 # (Cout_p,)
    msq = jnp.sum(sumsqs, axis=0)[:, 0] / count                # (Cout_p,)
    var = jnp.maximum(msq - mean * mean, 0.0)                  # biased variance
    inv = jax.lax.rsqrt(var + 1e-5)                            # PyTorch BN eps
    g = jnp.pad(gamma, (0, Cout_p - Cout), constant_values=1.0)
    b = jnp.pad(beta, (0, Cout_p - Cout))
    scale = (g * inv).reshape(Cout_p, 1).astype(jnp.float32)
    shift = (b - mean * g * inv).reshape(Cout_p, 1).astype(jnp.float32)

    # ---- phase 2: fused affine + ReLU on lane-dense tiles ----
    y = pl.pallas_call(
        _bn_relu_kernel,
        out_shape=jax.ShapeDtypeStruct((Cout_p, Mp), x_nchw.dtype),
        grid_spec=pltpu.PrefetchScalarGridSpec(
            num_scalar_prefetch=0,
            grid=(n_tiles,),
            in_specs=[
                pl.BlockSpec((Cout_p, tm), lambda i: (0, i)),
                pl.BlockSpec((Cout_p, 1), lambda i: (0, 0)),
                pl.BlockSpec((Cout_p, 1), lambda i: (0, 0)),
            ],
            out_specs=pl.BlockSpec((Cout_p, tm), lambda i: (0, i)),
        ),
        compiler_params=cparams,
    )(conv_flat, scale, shift)

    # crop channel/column padding, back to NCHW
    y = y[:Cout, :M].reshape(Cout, N, H_out, W_out)
    return jnp.transpose(y, (1, 0, 2, 3))


def reference(x, weight, gamma, beta, *, stride=1):
    """Pure-JAX reference (same bf16-operand / f32-accumulate matmul precision)."""
    K = weight.shape[2]
    pad = (K - 1) // 2
    conv = jax.lax.conv_general_dilated(
        x.astype(jnp.bfloat16), weight.astype(jnp.bfloat16),
        window_strides=(stride, stride),
        padding=((pad, pad), (pad, pad)),
        dimension_numbers=("NCHW", "OIHW", "NCHW"),
        preferred_element_type=jnp.float32)
    mean = jnp.mean(conv, axis=(0, 2, 3), keepdims=True)
    var = jnp.mean((conv - mean) ** 2, axis=(0, 2, 3), keepdims=True)
    y = ((conv - mean) * jax.lax.rsqrt(var + 1e-5)
         * gamma.reshape(1, -1, 1, 1) + beta.reshape(1, -1, 1, 1))
    return jnp.maximum(y, 0.0)


if __name__ == "__main__":
    key = jax.random.PRNGKey(0)
    k_x, k_w, k_g, k_b = jax.random.split(key, 4)

    # Convolution(convSize=3, inputDimension=4, outputDimension=8, stride=1, batchNorm=True)
    N, Cin, H, W = 2, 4, 16, 16
    Cout, K = 8, 3

    x = jax.random.normal(k_x, (N, Cin, H, W), jnp.float32)
    fan_in = float(Cin * K * K)
    bound = 1.0 / (fan_in ** 0.5)
    weight = jax.random.uniform(k_w, (Cout, Cin, K, K), jnp.float32, -bound, bound)
    gamma = jax.random.uniform(k_g, (Cout,), jnp.float32, 0.5, 1.5)
    beta = jax.random.normal(k_b, (Cout,), jnp.float32) * 0.1

    # tm=256 -> 2 lane tiles over M = N*H*W = 512 (exercises the tiled/partial-stats path).
    out = convolution_forward(x, weight, gamma, beta, stride=1, tm=256)
    jax.block_until_ready(out)

    ref = reference(x, weight, gamma, beta, stride=1)
    assert out.shape == (N, Cout, H, W), out.shape
    max_err = float(jnp.max(jnp.abs(out - ref)))
    assert jnp.allclose(out, ref, atol=2e-3, rtol=2e-3), max_err
    print("KERNEL_OK")
</pallas_src>

<mosaic_0001>
module attributes {stable_mosaic.version = 11 : i64} {
  func.func @_conv_stats_kernel(%arg0: i32, %arg1: memref<40x256xbf16, #tpu.memory_space<vmem>>, %arg2: memref<8x40xbf16, #tpu.memory_space<vmem>>, %arg3: memref<8x256xf32, #tpu.memory_space<vmem>>, %arg4: memref<1x8x1xf32, #tpu.memory_space<vmem>>, %arg5: memref<1x8x1xf32, #tpu.memory_space<vmem>>) attributes {dimension_semantics = [#tpu.dimension_semantics<parallel>], iteration_bounds = array<i64: 2>, scalar_prefetch = 0 : i64, scratch_operands = 0 : i64, tpu.core_type = #tpu.core_type<tc>, window_params = [{transform_indices = @transform_0, window_bounds = array<i64: 40, 256>}, {pipeline_mode = #tpu.pipeline_mode<synchronous>, transform_indices = @transform_1, window_bounds = array<i64: 8, 40>}, {transform_indices = @transform_2, window_bounds = array<i64: 8, 256>}, {transform_indices = @transform_3, window_bounds = array<i64: 1, 8, 1>}, {transform_indices = @transform_4, window_bounds = array<i64: 1, 8, 1>}]} {
    %c0 = arith.constant 0 : index
    %c0_0 = arith.constant 0 : index
    %0 = vector.load %arg2[%c0, %c0_0] : memref<8x40xbf16, #tpu.memory_space<vmem>>, vector<8x40xbf16>
    %c0_1 = arith.constant 0 : index
    %c0_2 = arith.constant 0 : index
    %1 = vector.load %arg1[%c0_1, %c0_2] : memref<40x256xbf16, #tpu.memory_space<vmem>>, vector<40x256xbf16>
    %cst = arith.constant dense<0.000000e+00> : vector<8x256xf32>
    %2 = tpu.matmul %0, %1, %cst {dimension_numbers = #tpu.dot_dimension_numbers<[1], [0], [0], [1], [0, 0, 1, 1], [], []>} : vector<8x40xbf16>, vector<40x256xbf16>, vector<8x256xf32> -> vector<8x256xf32>
    %c0_3 = arith.constant 0 : index
    %c0_4 = arith.constant 0 : index
    %3 = vector.load %arg3[%c0_3, %c0_4] : memref<8x256xf32, #tpu.memory_space<vmem>>, vector<8x256xf32>
    tpu.vector_store %arg3[%c0_3, %c0_4], %2 {strides = array<i32>} : memref<8x256xf32, #tpu.memory_space<vmem>>, vector<8x256xf32>,
    %cst_5 = arith.constant dense<0.000000e+00> : vector<8xf32>
    %4 = vector.multi_reduction <add>, %2, %cst_5 [1] : vector<8x256xf32> to vector<8xf32>
    %5 = vector.shape_cast %4 : vector<8xf32> to vector<8x1xf32>
    %c0_6 = arith.constant 0 : index
    %c0_7 = arith.constant 0 : index
    %c0_8 = arith.constant 0 : index
    %6 = vector.load %arg4[%c0_6, %c0_7, %c0_8] : memref<1x8x1xf32, #tpu.memory_space<vmem>>, vector<1x8x1xf32>
    %7 = vector.shape_cast %6 : vector<1x8x1xf32> to vector<8x1xf32>
    %8 = vector.shape_cast %5 : vector<8x1xf32> to vector<1x8x1xf32>
    tpu.vector_store %arg4[%c0_6, %c0_7, %c0_8], %8 {strides = array<i32>} : memref<1x8x1xf32, #tpu.memory_space<vmem>>, vector<1x8x1xf32>,
    %9 = arith.mulf %2, %2 : vector<8x256xf32>
    %cst_9 = arith.constant dense<0.000000e+00> : vector<8xf32>
    %10 = vector.multi_reduction <add>, %9, %cst_9 [1] : vector<8x256xf32> to vector<8xf32>
    %11 = vector.shape_cast %10 : vector<8xf32> to vector<8x1xf32>
    %c0_10 = arith.constant 0 : index
    %c0_11 = arith.constant 0 : index
    %c0_12 = arith.constant 0 : index
    %12 = vector.load %arg5[%c0_10, %c0_11, %c0_12] : memref<1x8x1xf32, #tpu.memory_space<vmem>>, vector<1x8x1xf32>
    %13 = vector.shape_cast %12 : vector<1x8x1xf32> to vector<8x1xf32>
    %14 = vector.shape_cast %11 : vector<8x1xf32> to vector<1x8x1xf32>
    tpu.vector_store %arg5[%c0_10, %c0_11, %c0_12], %14 {strides = array<i32>} : memref<1x8x1xf32, #tpu.memory_space<vmem>>, vector<1x8x1xf32>,
    return
  }
  func.func @transform_0(%arg0: i32) -> (i32, i32) {
    %c0_i32 = arith.constant 0 : i32
    %c0_i32_0 = arith.constant 0 : i32
    return %c0_i32, %arg0 : i32, i32
  }
  func.func @transform_1(%arg0: i32) -> (i32, i32) {
    %c0_i32 = arith.constant 0 : i32
    %c0_i32_0 = arith.constant 0 : i32
    %c0_i32_1 = arith.constant 0 : i32
    return %c0_i32, %c0_i32_0 : i32, i32
  }
  func.func @transform_2(%arg0: i32) -> (i32, i32) {
    %c0_i32 = arith.constant 0 : i32
    %c0_i32_0 = arith.constant 0 : i32
    return %c0_i32, %arg0 : i32, i32
  }
  func.func @transform_3(%arg0: i32) -> (i32, i32, i32) {
    %c0_i32 = arith.constant 0 : i32
    %c0_i32_0 = arith.constant 0 : i32
    %c0_i32_1 = arith.constant 0 : i32
    return %arg0, %c0_i32, %c0_i32_0 : i32, i32, i32
  }
  func.func @transform_4(%arg0: i32) -> (i32, i32, i32) {
    %c0_i32 = arith.constant 0 : i32
    %c0_i32_0 = arith.constant 0 : i32
    %c0_i32_1 = arith.constant 0 : i32
    return %arg0, %c0_i32, %c0_i32_0 : i32, i32, i32
  }
}

module attributes {stable_mosaic.version = 11 : i64} {
  func.func @_bn_relu_kernel(%arg0: i32, %arg1: memref<8x256xf32, #tpu.memory_space<vmem>>, %arg2: memref<8x1xf32, #tpu.memory_space<vmem>>, %arg3: memref<8x1xf32, #tpu.memory_space<vmem>>, %arg4: memref<8x256xf32, #tpu.memory_space<vmem>>) attributes {dimension_semantics = [#tpu.dimension_semantics<parallel>], iteration_bounds = array<i64: 2>, scalar_prefetch = 0 : i64, scratch_operands = 0 : i64, tpu.core_type = #tpu.core_type<tc>, window_params = [{transform_indices = @transform_0, window_bounds = array<i64: 8, 256>}, {pipeline_mode = #tpu.pipeline_mode<synchronous>, transform_indices = @transform_1, window_bounds = array<i64: 8, 1>}, {pipeline_mode = #tpu.pipeline_mode<synchronous>, transform_indices = @transform_2, window_bounds = array<i64: 8, 1>}, {transform_indices = @transform_3, window_bounds = array<i64: 8, 256>}]} {
    %c0 = arith.constant 0 : index
    %c0_0 = arith.constant 0 : index
    %0 = vector.load %arg1[%c0, %c0_0] : memref<8x256xf32, #tpu.memory_space<vmem>>, vector<8x256xf32>
    %c0_1 = arith.constant 0 : index
    %c0_2 = arith.constant 0 : index
    %1 = vector.load %arg2[%c0_1, %c0_2] : memref<8x1xf32, #tpu.memory_space<vmem>>, vector<8x1xf32>
    %2 = vector.broadcast %1 : vector<8x1xf32> to vector<8x256xf32>
    %3 = arith.mulf %0, %2 : vector<8x256xf32>
    %c0_3 = arith.constant 0 : index
    %c0_4 = arith.constant 0 : index
    %4 = vector.load %arg3[%c0_3, %c0_4] : memref<8x1xf32, #tpu.memory_space<vmem>>, vector<8x1xf32>
    %5 = vector.broadcast %4 : vector<8x1xf32> to vector<8x256xf32>
    %6 = arith.addf %3, %5 : vector<8x256xf32>
    %cst = arith.constant 0.000000e+00 : f32
    %7 = vector.broadcast %cst : f32 to vector<8x256xf32>
    %8 = arith.maximumf %6, %7 : vector<8x256xf32>
    %c0_5 = arith.constant 0 : index
    %c0_6 = arith.constant 0 : index
    %9 = vector.load %arg4[%c0_5, %c0_6] : memref<8x256xf32, #tpu.memory_space<vmem>>, vector<8x256xf32>
    tpu.vector_store %arg4[%c0_5, %c0_6], %8 {strides = array<i32>} : memref<8x256xf32, #tpu.memory_space<vmem>>, vector<8x256xf32>,
    return
  }
  func.func @transform_0(%arg0: i32) -> (i32, i32) {
    %c0_i32 = arith.constant 0 : i32
    %c0_i32_0 = arith.constant 0 : i32
    return %c0_i32, %arg0 : i32, i32
  }
  func.func @transform_1(%arg0: i32) -> (i32, i32) {
    %c0_i32 = arith.constant 0 : i32
    %c0_i32_0 = arith.constant 0 : i32
    %c0_i32_1 = arith.constant 0 : i32
    return %c0_i32, %c0_i32_0 : i32, i32
  }
  func.func @transform_2(%arg0: i32) -> (i32, i32) {
    %c0_i32 = arith.constant 0 : i32
    %c0_i32_0 = arith.constant 0 : i32
    %c0_i32_1 = arith.constant 0 : i32
    return %c0_i32, %c0_i32_0 : i32, i32
  }
  func.func @transform_3(%arg0: i32) -> (i32, i32) {
    %c0_i32 = arith.constant 0 : i32
    %c0_i32_0 = arith.constant 0 : i32
    return %c0_i32, %arg0 : i32, i32
  }
}

</mosaic_0001>

<llo_original>
// kernel: convolution_forward.3
$region0: #{convolution_forward.3}
  #allocation0 [shape = 'u32[]', space=smem, size = 0x4, offset = 0x4, fixed_abs, tag = 'smem constant byte address 0x4 - core index']
  #allocation1 [shape = 'u32[144,128]{1,0:T(1,128)}', space=vmem, size = 0x12000, scoped, tag = 'internal scratch']
  %s0 = inlined_call_operand.vmem [shape: f32[8,512], index: 0, kind: input, shape index: {}]
  %s1 = inlined_call_operand.vmem [shape: f32[8,1], index: 1, kind: input, shape index: {}]
  %s2 = inlined_call_operand.vmem [shape: f32[8,1], index: 2, kind: input, shape index: {}]
  %s3 = inlined_call_operand.vmem [shape: f32[8,512], index: 3, kind: output, shape index: {}]
  %s4 = sld [smem:[#allocation0]]
  $region45: #{convolution_forward.3} parent=0
    _
  %s6 = ssub.s32 1, %s4
  %s7 = scalar_select 0, %s6, %s4
  loop: start=0, step=1, limit=4
  $region2: #{convolution_forward.3} parent=0 // loop_pre_header
    _
  $region3: #{convolution_forward.3} parent=0 // loop_header
    %s9 = sphi 0, %s13
    %p10 = scmp.ge.s32.totalorder %s9, 4
    %s19 = sphi 0, %s21
    %s22 = sphi 0, %s19
    %s23 = sphi 0, %s22
    %s39 = sphi 0, %s23
    %s43 = sphi 0, %s43
    %s45 = sphi 0, %s43
    %s46 = sphi 0, %s45
    %s60 = sphi 0, %s46
    %s64 = sphi 0, %s64
    %s66 = sphi 0, %s64
    %s67 = sphi 0, %s66
    %s81 = sphi 0, %s67
    %s87 = sphi 0, %s89
    %s90 = sphi 0, %s87
    %s91 = sphi 0, %s90
    %s107 = sphi 0, %s91
  $region4: #{convolution_forward.3} parent=0 // loop_header_branch
    %12 = sbr.rel (%p10) target = $region8
  $region5: #{convolution_forward.3} parent=0 // loop_body
    %s14 = ssub.s32 %s9, 1
    %s15 = ssub.s32 %s9, 2
    %s16 = sadd.s32 %s9, 1
    %s17 = ssub.s32 %s9, %s16
    %p18 = scmp.eq.s32.totalorder %s17, 0
    %s20 = sadd.s32 %s19, 1
    %s21 = scalar_select %p18, %s19, %s20
    %p24 = pneg %p18
    %p25 = scmp.eq.s32.totalorder %s9, 1
    %p26 = por %p24, %p25
    %p27 = scmp.ne.s32.totalorder %s19, %s22
    %p28 = scmp.eq.s32.totalorder %s9, 0
    %p29 = por %p27, %p28
    %p30 = scmp.ne.s32.totalorder %s19, %s22
    %p31 = scmp.eq.s32.totalorder %s14, 1
    %p32 = por %p30, %p31
    %p33 = scmp.ne.s32.totalorder %s22, %s23
    %p34 = scmp.eq.s32.totalorder %s14, 0
    %p35 = por %p33, %p34
    %p36 = scmp.ne.s32.totalorder %s22, %s23
    %p37 = scmp.eq.s32.totalorder %s15, 1
    %p38 = por %p36, %p37
    %p40 = scmp.ne.s32.totalorder %s23, %s39
    %p41 = scmp.eq.s32.totalorder %s15, 0
    %p42 = por %p40, %p41
    %s44 = sadd.s32 %s43, 1
    %p47 = scmp.eq.s32.totalorder %s9, 1
    %p48 = scmp.ne.s32.totalorder %s43, %s45
    %p49 = scmp.eq.s32.totalorder %s9, 0
    %p50 = por %p48, %p49
    %p51 = scmp.ne.s32.totalorder %s43, %s45
    %p52 = scmp.eq.s32.totalorder %s14, 1
    %p53 = por %p51, %p52
    %p54 = scmp.ne.s32.totalorder %s45, %s46
    %p55 = scmp.eq.s32.totalorder %s14, 0
    %p56 = por %p54, %p55
    %p57 = scmp.ne.s32.totalorder %s45, %s46
    %p58 = scmp.eq.s32.totalorder %s15, 1
    %p59 = por %p57, %p58
    %p61 = scmp.ne.s32.totalorder %s46, %s60
    %p62 = scmp.eq.s32.totalorder %s15, 0
    %p63 = por %p61, %p62
    %s65 = sadd.s32 %s64, 1
    %p68 = scmp.eq.s32.totalorder %s9, 1
    %p69 = scmp.ne.s32.totalorder %s64, %s66
    %p70 = scmp.eq.s32.totalorder %s9, 0
    %p71 = por %p69, %p70
    %p72 = scmp.ne.s32.totalorder %s64, %s66
    %p73 = scmp.eq.s32.totalorder %s14, 1
    %p74 = por %p72, %p73
    %p75 = scmp.ne.s32.totalorder %s66, %s67
    %p76 = scmp.eq.s32.totalorder %s14, 0
    %p77 = por %p75, %p76
    %p78 = scmp.ne.s32.totalorder %s66, %s67
    %p79 = scmp.eq.s32.totalorder %s15, 1
    %p80 = por %p78, %p79
    %p82 = scmp.ne.s32.totalorder %s67, %s81
    %p83 = scmp.eq.s32.totalorder %s15, 0
    %p84 = por %p82, %p83
    %s85 = ssub.s32 %s9, %s16
    %p86 = scmp.eq.s32.totalorder %s85, 0
    %s88 = sadd.s32 %s87, 1
    %s89 = scalar_select %p86, %s87, %s88
    %p92 = pneg %p86
    %p93 = scmp.eq.s32.totalorder %s9, 1
    %p94 = por %p92, %p93
    %p95 = scmp.ne.s32.totalorder %s87, %s90
    %p96 = scmp.eq.s32.totalorder %s9, 0
    %p97 = por %p95, %p96
    %p98 = scmp.ne.s32.totalorder %s87, %s90
    %p99 = scmp.eq.s32.totalorder %s14, 1
    %p100 = por %p98, %p99
    %p101 = scmp.ne.s32.totalorder %s90, %s91
    %p102 = scmp.eq.s32.totalorder %s14, 0
    %p103 = por %p101, %p102
    %p104 = scmp.ne.s32.totalorder %s90, %s91
    %p105 = scmp.eq.s32.totalorder %s15, 1
    %p106 = por %p104, %p105
    %p108 = scmp.ne.s32.totalorder %s91, %s107
    %p109 = scmp.eq.s32.totalorder %s15, 0
    %p110 = por %p108, %p109
    %p111 = scmp.le.s32.totalorder 1, %s9
    %p112 = scmp.lt.s32.totalorder %s9, 3
    %p113 = pnand %p111, %p112
    %p114 = pneg %p113
    // Predicated region
    $region9: #{convolution_forward.3} parent=5 // pred_check
      _
    $region10: #{convolution_forward.3} parent=5 // pred_check_branch
      %116 = sbr.rel (%p113) target = $region12
    $region11: #{convolution_forward.3} parent=5 // pred_region
      %s117 = ssub.s32 %s9, 1
      // Predicated region
      $region13: #{convolution_forward.3} parent=11 // pred_check
        %p118 = pneg %p56
      $region14: #{convolution_forward.3} parent=11 // pred_check_branch
        %120 = sbr.rel (%p118) target = $region16
      $region15: #{convolution_forward.3} parent=11 // pred_region
        _
      $region16: #{convolution_forward.3} parent=11 // pred_fallthru
        _
      // Predicated region
      $region17: #{convolution_forward.3} parent=11 // pred_check
        %p121 = pneg %p77
      $region18: #{convolution_forward.3} parent=11 // pred_check_branch
        %123 = sbr.rel (%p121) target = $region20
      $region19: #{convolution_forward.3} parent=11 // pred_region
        _
      $region20: #{convolution_forward.3} parent=11 // pred_fallthru
        _
    $region12: #{convolution_forward.3} parent=5 // pred_fallthru
      _
    %p124 = scmp.lt.s32.totalorder %s9, 2
    // Predicated region
    $region21: #{convolution_forward.3} parent=5 // pred_check
      %p125 = pneg %p124
    $region22: #{convolution_forward.3} parent=5 // pred_check_branch
      %127 = sbr.rel (%p125) target = $region24
    $region23: #{convolution_forward.3} parent=5 // pred_region
      // Predicated region
      $region25: #{convolution_forward.3} parent=23 // pred_check
        %p128 = pneg %p29
      $region26: #{convolution_forward.3} parent=23 // pred_check_branch
        %130 = sbr.rel (%p128) target = $region28
      $region27: #{convolution_forward.3} parent=23 // pred_region
        %s131 = smul.u32 2, %s9
        %p132 = scmp.lt.s32.totalorder %s131, 3
        %s133 = scalar_select %p132, %s131, 3
        %s134 = smul.addr %s133, 8
        %s135 = scalar_lea.vmem %s0, %s134
        %s136 = smul.u32 2, %s9
      $region28: #{convolution_forward.3} parent=23 // pred_fallthru
        _
    $region24: #{convolution_forward.3} parent=5 // pred_fallthru
      _
    %p137 = scmp.le.s32.totalorder 1, %s9
    %p138 = scmp.lt.s32.totalorder %s9, 3
    %p139 = pnand %p137, %p138
    %p140 = pneg %p139
    // Predicated region
    $region29: #{convolution_forward.3} parent=5 // pred_check
      _
    $region30: #{convolution_forward.3} parent=5 // pred_check_branch
      %142 = sbr.rel (%p139) target = $region32
    $region31: #{convolution_forward.3} parent=5 // pred_region
      %s143 = ssub.s32 %s9, 1
      %s144 = smul.u32 2, %s14
      %p145 = scmp.lt.s32.totalorder %s144, 3
      %s146 = scalar_select %p145, %s144, 3
      %s147 = smul.addr %s146, 8
      %s148 = scalar_lea.vmem %s0, %s147
      %p149 = pneg %p35
      %p150 = pneg %p32
      %p151 = pneg %p56
      %p152 = pneg %p53
      %p153 = pneg %p77
      %p154 = pneg %p74
      %p155 = pneg %p103
      %p156 = pneg %p100
      %s157 = smul.u32 2, %s14
      %p158 = scmp.lt.s32.totalorder %s157, 3
      %s159 = scalar_select %p158, %s157, 3
      %s160 = smul.addr %s159, 8
      %s161 = scalar_lea.vmem %s3, %s160
      %s162 = smul.u32 2, %s14
      %p163 = scmp.lt.s32.totalorder %s162, 3
      %s164 = scalar_select %p163, %s162, 3
      %s165 = smul.addr %s164, 8
      %s166 = scalar_lea.vmem %s0, %s165
      %s167 = smul.u32 2, %s14
      %s168 = smul.u32 2, %s14
      %p169 = scmp.lt.s32.totalorder %s168, 3
      %s170 = scalar_select %p169, %s168, 3
      %s171 = smul.addr %s170, 8
      %s172 = scalar_lea.vmem %s3, %s171
      %s173 = smul.u32 2, %s14
      %v174 = vld [vmem:[%s166] sm:$0xff]
      %v175 = vld [vmem:[%s166 + $0x8] sm:$0xff]
      %v176 = vld [vmem:[%s1] sm:$0xff]
      %178 = vset.pattern.permute.xlu0 0
      %179 = vperm.xlu0 %178, %v176
      %v180 = vpop.permute.xlu0 %179
      %v182 = vmul.f32 %v174, %v180
      %v183 = vmul.f32 %v175, %v180
      %v184 = vld [vmem:[%s2] sm:$0xff]
      %186 = vset.pattern.permute.xlu0 0
      %187 = vperm.xlu0 %186, %v184
      %v188 = vpop.permute.xlu0 %187
      %v190 = vadd.f32 %v182, %v188
      %v191 = vadd.f32 %v183, %v188
      %v192 = vmax.f32 %v190, 0.0
      %v193 = vmax.f32 %v191, 0.0
      %194 = vst [vmem:[%s172] sm:$0xff] %v192
      %195 = vst [vmem:[%s172 + $0x8] sm:$0xff] %v193
      %s196 = smul.u32 2, %s14
      %p197 = scmp.lt.s32.totalorder %s196, 3
      %s198 = scalar_select %p197, %s196, 3
      %s199 = smul.addr %s198, 8
      %s200 = scalar_lea.vmem %s3, %s199
      // Predicated region
      $region33: #{convolution_forward.3} parent=31 // pred_check
        %p201 = pneg %p100
      $region34: #{convolution_forward.3} parent=31 // pred_check_branch
        %203 = sbr.rel (%p201) target = $region36
      $region35: #{convolution_forward.3} parent=31 // pred_region
        %s204 = smul.u32 2, %s14
      $region36: #{convolution_forward.3} parent=31 // pred_fallthru
        _
    $region32: #{convolution_forward.3} parent=5 // pred_fallthru
      _
    %p205 = scmp.le.s32.totalorder 2, %s9
    // Predicated region
    $region37: #{convolution_forward.3} parent=5 // pred_check
      %p206 = pneg %p205
    $region38: #{convolution_forward.3} parent=5 // pred_check_branch
      %208 = sbr.rel (%p206) target = $region40
    $region39: #{convolution_forward.3} parent=5 // pred_region
      %s209 = ssub.s32 %s9, 2
      // Predicated region
      $region41: #{convolution_forward.3} parent=39 // pred_check
        %p210 = pneg %p106
      $region42: #{convolution_forward.3} parent=39 // pred_check_branch
        %212 = sbr.rel (%p210) target = $region44
      $region43: #{convolution_forward.3} parent=39 // pred_region
        %s213 = smul.u32 2, %s15
        %p214 = scmp.lt.s32.totalorder %s213, 3
        %s215 = scalar_select %p214, %s213, 3
        %s216 = smul.addr %s215, 8
        %s217 = scalar_lea.vmem %s3, %s216
      $region44: #{convolution_forward.3} parent=39 // pred_fallthru
        _
    $region40: #{convolution_forward.3} parent=5 // pred_fallthru
      _
  $region6: #{convolution_forward.3} parent=0 // loop_footer
    %s13 = sadd.s32 1, %s9
  $region7: #{convolution_forward.3} parent=0 // loop_footer_branch
    %8 = sbr.rel target = $region3
  $region8: #{convolution_forward.3} parent=0 // loop_exit
    _

// kernel: convolution_forward.2
$region0: #{convolution_forward.2}
  #allocation0 [shape = 'u32[]', space=smem, size = 0x4, offset = 0x4, fixed_abs, tag = 'smem constant byte address 0x4 - core index']
  #allocation1 [shape = 'u32[144,128]{1,0:T(1,128)}', space=vmem, size = 0x12000, scoped, tag = 'internal scratch']
  %s0 = inlined_call_operand.vmem [shape: bf16[40,512], index: 0, kind: input, shape index: {}]
  %s1 = inlined_call_operand.vmem [shape: bf16[8,40], index: 1, kind: input, shape index: {}]
  %s2 = inlined_call_operand.vmem [shape: f32[8,512], index: 2, kind: output, shape index: {0}]
  %s3 = inlined_call_operand.vmem [shape: f32[2,8,1], index: 3, kind: output, shape index: {1}]
  %s4 = inlined_call_operand.vmem [shape: f32[2,8,1], index: 4, kind: output, shape index: {2}]
  %5 = xla_tuple %s2, %s3, %s4
  %s6 = sld [smem:[#allocation0]]
  $region95: #{convolution_forward.2} parent=0
    _
  %s8 = ssub.s32 1, %s6
  %s9 = scalar_select 0, %s8, %s6
  $region1: #{convolution_forward.2} parent=0
    #allocation2 [shape = 'u8[40960]{0}', space=vmem, size = 0xa000, scoped, tag = 'input window, operand 0']
    loop: start=0, step=1, limit=4
    $region2: #{convolution_forward.2} parent=1 // loop_pre_header
      _
    $region3: #{convolution_forward.2} parent=1 // loop_header
      %s11 = sphi 0, %s15
      %p12 = scmp.ge.s32.totalorder %s11, 4
      %s21 = sphi 0, %s23
      %s24 = sphi 0, %s21
      %s25 = sphi 0, %s24
      %s41 = sphi 0, %s25
      %s45 = sphi 0, %s45
      %s47 = sphi 0, %s45
      %s48 = sphi 0, %s47
      %s62 = sphi 0, %s48
      %s68 = sphi 0, %s70
      %s71 = sphi 0, %s68
      %s72 = sphi 0, %s71
      %s88 = sphi 0, %s72
      %s94 = sphi 0, %s96
      %s97 = sphi 0, %s94
      %s98 = sphi 0, %s97
      %s114 = sphi 0, %s98
      %s120 = sphi 0, %s122
      %s123 = sphi 0, %s120
      %s124 = sphi 0, %s123
      %s140 = sphi 0, %s124
    $region4: #{convolution_forward.2} parent=1 // loop_header_branch
      %14 = sbr.rel (%p12) target = $region8
    $region5: #{convolution_forward.2} parent=1 // loop_body
      %s16 = ssub.s32 %s11, 1
      %s17 = ssub.s32 %s11, 2
      %s18 = sadd.s32 %s11, 1
      %s19 = ssub.s32 %s11, %s18
      %p20 = scmp.eq.s32.totalorder %s19, 0
      %s22 = sadd.s32 %s21, 1
      %s23 = scalar_select %p20, %s21, %s22
      %p26 = pneg %p20
      %p27 = scmp.eq.s32.totalorder %s11, 1
      %p28 = por %p26, %p27
      %p29 = scmp.ne.s32.totalorder %s21, %s24
      %p30 = scmp.eq.s32.totalorder %s11, 0
      %p31 = por %p29, %p30
      %p32 = scmp.ne.s32.totalorder %s21, %s24
      %p33 = scmp.eq.s32.totalorder %s16, 1
      %p34 = por %p32, %p33
      %p35 = scmp.ne.s32.totalorder %s24, %s25
      %p36 = scmp.eq.s32.totalorder %s16, 0
      %p37 = por %p35, %p36
      %p38 = scmp.ne.s32.totalorder %s24, %s25
      %p39 = scmp.eq.s32.totalorder %s17, 1
      %p40 = por %p38, %p39
      %p42 = scmp.ne.s32.totalorder %s25, %s41
      %p43 = scmp.eq.s32.totalorder %s17, 0
      %p44 = por %p42, %p43
      %s46 = sadd.s32 %s45, 1
      %p49 = scmp.eq.s32.totalorder %s11, 1
      %p50 = scmp.ne.s32.totalorder %s45, %s47
      %p51 = scmp.eq.s32.totalorder %s11, 0
      %p52 = por %p50, %p51
      %p53 = scmp.ne.s32.totalorder %s45, %s47
      %p54 = scmp.eq.s32.totalorder %s16, 1
      %p55 = por %p53, %p54
      %p56 = scmp.ne.s32.totalorder %s47, %s48
      %p57 = scmp.eq.s32.totalorder %s16, 0
      %p58 = por %p56, %p57
      %p59 = scmp.ne.s32.totalorder %s47, %s48
      %p60 = scmp.eq.s32.totalorder %s17, 1
      %p61 = por %p59, %p60
      %p63 = scmp.ne.s32.totalorder %s48, %s62
      %p64 = scmp.eq.s32.totalorder %s17, 0
      %p65 = por %p63, %p64
      %s66 = ssub.s32 %s11, %s18
      %p67 = scmp.eq.s32.totalorder %s66, 0
      %s69 = sadd.s32 %s68, 1
      %s70 = scalar_select %p67, %s68, %s69
      %p73 = pneg %p67
      %p74 = scmp.eq.s32.totalorder %s11, 1
      %p75 = por %p73, %p74
      %p76 = scmp.ne.s32.totalorder %s68, %s71
      %p77 = scmp.eq.s32.totalorder %s11, 0
      %p78 = por %p76, %p77
      %p79 = scmp.ne.s32.totalorder %s68, %s71
      %p80 = scmp.eq.s32.totalorder %s16, 1
      %p81 = por %p79, %p80
      %p82 = scmp.ne.s32.totalorder %s71, %s72
      %p83 = scmp.eq.s32.totalorder %s16, 0
      %p84 = por %p82, %p83
      %p85 = scmp.ne.s32.totalorder %s71, %s72
      %p86 = scmp.eq.s32.totalorder %s17, 1
      %p87 = por %p85, %p86
      %p89 = scmp.ne.s32.totalorder %s72, %s88
      %p90 = scmp.eq.s32.totalorder %s17, 0
      %p91 = por %p89, %p90
      %s92 = ssub.s32 %s11, %s18
      %p93 = scmp.eq.s32.totalorder %s92, 0
      %s95 = sadd.s32 %s94, 1
      %s96 = scalar_select %p93, %s94, %s95
      %p99 = pneg %p93
      %p100 = scmp.eq.s32.totalorder %s11, 1
      %p101 = por %p99, %p100
      %p102 = scmp.ne.s32.totalorder %s94, %s97
      %p103 = scmp.eq.s32.totalorder %s11, 0
      %p104 = por %p102, %p103
      %p105 = scmp.ne.s32.totalorder %s94, %s97
      %p106 = scmp.eq.s32.totalorder %s16, 1
      %p107 = por %p105, %p106
      %p108 = scmp.ne.s32.totalorder %s97, %s98
      %p109 = scmp.eq.s32.totalorder %s16, 0
      %p110 = por %p108, %p109
      %p111 = scmp.ne.s32.totalorder %s97, %s98
      %p112 = scmp.eq.s32.totalorder %s17, 1
      %p113 = por %p111, %p112
      %p115 = scmp.ne.s32.totalorder %s98, %s114
      %p116 = scmp.eq.s32.totalorder %s17, 0
      %p117 = por %p115, %p116
      %s118 = ssub.s32 %s11, %s18
      %p119 = scmp.eq.s32.totalorder %s118, 0
      %s121 = sadd.s32 %s120, 1
      %s122 = scalar_select %p119, %s120, %s121
      %p125 = pneg %p119
      %p126 = scmp.eq.s32.totalorder %s11, 1
      %p127 = por %p125, %p126
      %p128 = scmp.ne.s32.totalorder %s120, %s123
      %p129 = scmp.eq.s32.totalorder %s11, 0
      %p130 = por %p128, %p129
      %p131 = scmp.ne.s32.totalorder %s120, %s123
      %p132 = scmp.eq.s32.totalorder %s16, 1
      %p133 = por %p131, %p132
      %p134 = scmp.ne.s32.totalorder %s123, %s124
      %p135 = scmp.eq.s32.totalorder %s16, 0
      %p136 = por %p134, %p135
      %p137 = scmp.ne.s32.totalorder %s123, %s124
      %p138 = scmp.eq.s32.totalorder %s17, 1
      %p139 = por %p137, %p138
      %p141 = scmp.ne.s32.totalorder %s124, %s140
      %p142 = scmp.eq.s32.totalorder %s17, 0
      %p143 = por %p141, %p142
      %p144 = scmp.le.s32.totalorder 1, %s11
      %p145 = scmp.lt.s32.totalorder %s11, 3
      %p146 = pnand %p144, %p145
      %p147 = pneg %p146
      // Predicated region
      $region9: #{convolution_forward.2} parent=5 // pred_check
        _
      $region10: #{convolution_forward.2} parent=5 // pred_check_branch
        %149 = sbr.rel (%p146) target = $region12
      $region11: #{convolution_forward.2} parent=5 // pred_region
        %s150 = ssub.s32 %s11, 1
        // Predicated region
        $region13: #{convolution_forward.2} parent=11 // pred_check
          %p151 = pneg %p58
        $region14: #{convolution_forward.2} parent=11 // pred_check_branch
          %153 = sbr.rel (%p151) target = $region16
        $region15: #{convolution_forward.2} parent=11 // pred_region
          _
        $region16: #{convolution_forward.2} parent=11 // pred_fallthru
          _
      $region12: #{convolution_forward.2} parent=5 // pred_fallthru
        _
      %p154 = scmp.lt.s32.totalorder %s11, 2
      // Predicated region
      $region17: #{convolution_forward.2} parent=5 // pred_check
        %p155 = pneg %p154
      $region18: #{convolution_forward.2} parent=5 // pred_check_branch
        %157 = sbr.rel (%p155) target = $region20
      $region19: #{convolution_forward.2} parent=5 // pred_region
        // Predicated region
        $region21: #{convolution_forward.2} parent=19 // pred_check
          %p158 = pneg %p31
        $region22: #{convolution_forward.2} parent=19 // pred_check_branch
          %160 = sbr.rel (%p158) target = $region24
        $region23: #{convolution_forward.2} parent=19 // pred_region
          %s161 = sand.u32 %s21, 1
          %s162 = sand.u32 %s21, 1
          %s163 = smul.addr %s162, 40
          %s164 = scalar_lea.vmem [#allocation2], %s163
          %s165 = smul.u32 2, %s11
          %s166 = smul.addr %s165, 4
          %s167 = scalar_lea.vmem %s0, %s166
          // Predicated region
          $region25: #{convolution_forward.2} parent=23 // pred_check
            _
          $region26: #{convolution_forward.2} parent=23 // pred_check_branch
            %169 = sbr.rel (0) target = $region28
          $region27: #{convolution_forward.2} parent=23 // pred_region
            // Predicated region
            $region29: #{convolution_forward.2} parent=27 // pred_check
              _
            $region30: #{convolution_forward.2} parent=27 // pred_check_branch
              %171 = sbr.rel (0) target = $region32
            $region31: #{convolution_forward.2} parent=27 // pred_region
              // Predicated region
              $region44: #{convolution_forward.2} parent=31 // pred_check
                _
              $region45: #{convolution_forward.2} parent=31 // pred_check_branch
                %194 = sbr.rel (0) target = $region47
              $region46: #{convolution_forward.2} parent=31 // pred_region
                loop: start=0, step=1, limit=1
                $region48: #{convolution_forward.2} parent=46 // loop_pre_header
                  _
                $region49: #{convolution_forward.2} parent=46 // loop_header
                  %s196 = sphi 0, %s200
                  %p197 = scmp.ge.s32.totalorder %s196, 1
                  %s201 = sphi %s167, %s167
                  %s202 = sphi %s164, %s164
                $region50: #{convolution_forward.2} parent=46 // loop_header_branch
                  %199 = sbr.rel (%p197) target = $region54
                $region51: #{convolution_forward.2} parent=46 // loop_body
                  %v203 = vld [vmem:[%s201] sm:$0xff]
                  %204 = vst [vmem:[%s202] sm:$0xff] %v203
                  %v205 = vld [vmem:[%s201 + $0x10] sm:$0xff]
                  %206 = vst [vmem:[%s202 + $0x8] sm:$0xff] %v205
                  %v207 = vld [vmem:[%s201 + $0x20] sm:$0xff]
                  %208 = vst [vmem:[%s202 + $0x10] sm:$0xff] %v207
                  %v209 = vld [vmem:[%s201 + $0x30] sm:$0xff]
                  %210 = vst [vmem:[%s202 + $0x18] sm:$0xff] %v209
                  %v211 = vld [vmem:[%s201 + $0x40] sm:$0xff]
                  %212 = vst [vmem:[%s202 + $0x20] sm:$0xff] %v211
                $region52: #{convolution_forward.2} parent=46 // loop_footer
                  %s200 = sadd.s32 1, %s196
                $region53: #{convolution_forward.2} parent=46 // loop_footer_branch
                  %195 = sbr.rel target = $region49
                $region54: #{convolution_forward.2} parent=46 // loop_exit
                  _
              $region47: #{convolution_forward.2} parent=31 // pred_fallthru
                _
              // Predicated region
              $region55: #{convolution_forward.2} parent=31 // pred_check
                _
              $region56: #{convolution_forward.2} parent=31 // pred_check_branch
                %214 = sbr.rel target = $region58
              $region57: #{convolution_forward.2} parent=31 // pred_region
                _
              $region58: #{convolution_forward.2} parent=31 // pred_fallthru
                _
            $region32: #{convolution_forward.2} parent=27 // pred_fallthru
              _
            // Predicated region
            $region33: #{convolution_forward.2} parent=27 // pred_check
              _
            $region34: #{convolution_forward.2} parent=27 // pred_check_branch
              %173 = sbr.rel target = $region36
            $region35: #{convolution_forward.2} parent=27 // pred_region
              loop: start=0, step=1, limit=1
              $region37: #{convolution_forward.2} parent=35 // loop_pre_header
                _
              $region38: #{convolution_forward.2} parent=35 // loop_header
                %s176 = sphi 0, %s180
                %p177 = scmp.ge.s32.totalorder %s176, 1
                %s181 = sphi %s167, %s167
                %s182 = sphi %s164, %s164
              $region39: #{convolution_forward.2} parent=35 // loop_header_branch
                %179 = sbr.rel (%p177) target = $region43
              $region40: #{convolution_forward.2} parent=35 // loop_body
                %v183 = vld [vmem:[%s181] sm:$0xff]
                %184 = vst [vmem:[%s182] sm:$0xff] %v183
                %v185 = vld [vmem:[%s181 + $0x10] sm:$0xff]
                %186 = vst [vmem:[%s182 + $0x8] sm:$0xff] %v185
                %v187 = vld [vmem:[%s181 + $0x20] sm:$0xff]
                %188 = vst [vmem:[%s182 + $0x10] sm:$0xff] %v187
                %v189 = vld [vmem:[%s181 + $0x30] sm:$0xff]
                %190 = vst [vmem:[%s182 + $0x18] sm:$0xff] %v189
                %v191 = vld [vmem:[%s181 + $0x40] sm:$0xff]
                %192 = vst [vmem:[%s182 + $0x20] sm:$0xff] %v191
              $region41: #{convolution_forward.2} parent=35 // loop_footer
                %s180 = sadd.s32 1, %s176
              $region42: #{convolution_forward.2} parent=35 // loop_footer_branch
                %175 = sbr.rel target = $region38
              $region43: #{convolution_forward.2} parent=35 // loop_exit
                _
            $region36: #{convolution_forward.2} parent=27 // pred_fallthru
              _
          $region28: #{convolution_forward.2} parent=23 // pred_fallthru
            _
          %215 = vnop
        $region24: #{convolution_forward.2} parent=19 // pred_fallthru
          _
      $region20: #{convolution_forward.2} parent=5 // pred_fallthru
        _
      %p216 = scmp.le.s32.totalorder 1, %s11
      %p217 = scmp.lt.s32.totalorder %s11, 3
      %p218 = pnand %p216, %p217
      %p219 = pneg %p218
      // Predicated region
      $region59: #{convolution_forward.2} parent=5 // pred_check
        _
      $region60: #{convolution_forward.2} parent=5 // pred_check_branch
        %221 = sbr.rel (%p218) target = $region62
      $region61: #{convolution_forward.2} parent=5 // pred_region
        %s222 = ssub.s32 %s11, 1
        %s223 = sand.u32 %s24, 1
        %s224 = sand.u32 %s24, 1
        %s225 = smul.addr %s224, 40
        %s226 = scalar_lea.vmem [#allocation2], %s225
        // Predicated region
        $region63: #{convolution_forward.2} parent=61 // pred_check
          %p227 = pneg %p37
        $region64: #{convolution_forward.2} parent=61 // pred_check_branch
          %229 = sbr.rel (%p227) target = $region66
        $region65: #{convolution_forward.2} parent=61 // pred_region
          _
        $region66: #{convolution_forward.2} parent=61 // pred_fallthru
          _
        %s230 = sand.u32 %s24, 1
        %s231 = sand.u32 %s24, 1
        %s232 = smul.addr %s231, 40
        %s233 = scalar_lea.vmem [#allocation2], %s232
        %p234 = pneg %p37
        %p235 = pneg %p34
        %p236 = pneg %p58
        %p237 = pneg %p55
        %p238 = pneg %p84
        %p239 = pneg %p81
        %s240 = smul.u32 2, %s16
        %p241 = scmp.lt.s32.totalorder %s240, 3
        %s242 = scalar_select %p241, %s240, 3
        %s243 = smul.addr %s242, 8
        %s244 = scalar_lea.vmem %s2, %s243
        %p245 = pneg %p110
        %p246 = pneg %p107
        %p247 = scmp.lt.s32.totalorder %s16, 1
        %s248 = scalar_select %p247, %s16, 1
        %s249 = smul.addr %s248, 8
        %s250 = scalar_lea.vmem %s3, %s249
        %p251 = pneg %p136
        %p252 = pneg %p133
        %p253 = scmp.lt.s32.totalorder %s16, 1
        %s254 = scalar_select %p253, %s16, 1
        %s255 = smul.addr %s254, 8
        %s256 = scalar_lea.vmem %s4, %s255
        %s257 = smul.u32 2, %s16
        %s258 = smul.u32 2, %s16
        %p259 = scmp.lt.s32.totalorder %s258, 3
        %s260 = scalar_select %p259, %s258, 3
        %s261 = smul.addr %s260, 8
        %s262 = scalar_lea.vmem %s2, %s261
        %s263 = smul.u32 2, %s16
        %p264 = scmp.lt.s32.totalorder %s16, 1
        %s265 = scalar_select %p264, %s16, 1
        %s266 = smul.addr %s265, 8
        %s267 = scalar_lea.vmem %s3, %s266
        %p268 = scmp.lt.s32.totalorder %s16, 1
        %s269 = scalar_select %p268, %s16, 1
        %s270 = smul.addr %s269, 8
        %s271 = scalar_lea.vmem %s4, %s270
        %v273 = vld [vmem:[%s1] sm:$0xf]
        %v274 = vld [vmem:[%s226] sm:$0xff]
        %v275 = vld [vmem:[%s226 + $0x8] sm:$0xff]
        %v276 = vld [vmem:[%s226 + $0x10] sm:$0xff]
        %v277 = vld [vmem:[%s226 + $0x18] sm:$0xff]
        %v278 = vld [vmem:[%s226 + $0x20] sm:$0xff]
        %v284 = vunpack.c.l.b16 %v274
        %v285 = vunpack.c.h.b16 %v274
        %v286 = vunpack.c.l.b16 %v275
        %v287 = vunpack.c.h.b16 %v275
        %v288 = vunpack.c.l.b16 %v276
        %v289 = vunpack.c.h.b16 %v276
        %v290 = vunpack.c.l.b16 %v277
        %v291 = vunpack.c.h.b16 %v277
        %v292 = vunpack.c.l.b16 %v278
        %v293 = vunpack.c.h.b16 %v278
        %v294 = vpack.c.b16 %v286, %v284
        %v295 = vpack.c.b16 %v287, %v285
        %v296 = vpack.c.b16 %v290, %v288
        %v297 = vpack.c.b16 %v291, %v289
        %v298 = vpack.c.b16 %v292, %v292
        %v299 = vpack.c.b16 %v293, %v293
        %vm304 = vcmask 326656
        %v306 = vsel %vm304, %v273, 0
        %vm308 = vcmask 1043456
        %v310 = vsel %vm308, %v298, 0
        %v313 = vsel %vm308, %v299, 0
        %315 = vmatprep.subr.bf16.mxu0 %v295
        %316 = vmatpush1.bf16.msra.mxu0 %v294
        %317 = vmatprep.subr.bf16.mxu0 %v297
        %318 = vmatpush1.bf16.msra.mxu0 %v296
        %319 = vmatprep.subr.bf16.mxu0 %v313
        %320 = vmatpush1.bf16.msra.mxu0 %v310
        %321 = vmatprep.subr.bf16.mxu0 0
        %322 = vmatpush1.bf16.msra.mxu0 0
        %323 = vmatprep.subr.bf16.mxu0 0
        %324 = vmatpush1.bf16.msra.mxu0 0
        %325 = vmatprep.subr.bf16.mxu0 0
        %326 = vmatpush1.bf16.msra.mxu0 0
        %327 = vmatprep.subr.bf16.mxu0 0
        %328 = vmatpush1.bf16.msra.mxu0 0
        %329 = vmatprep.subr.bf16.mxu0 0
        %330 = vmatpush1.bf16.msra.mxu0 0
        %331 = vmatprep.subr.bf16.mxu0 0
        %332 = vmatpush1.bf16.msra.mxu0 0
        %333 = vmatprep.subr.bf16.mxu0 0
        %334 = vmatpush1.bf16.msra.mxu0 0
        %335 = vmatprep.subr.bf16.mxu0 0
        %336 = vmatpush1.bf16.msra.mxu0 0
        %337 = vmatprep.subr.bf16.mxu0 0
        %338 = vmatpush1.bf16.msra.mxu0 0
        %339 = vmatprep.subr.bf16.mxu0 0
        %340 = vmatpush1.bf16.msra.mxu0 0
        %341 = vmatprep.subr.bf16.mxu0 0
        %342 = vmatpush1.bf16.msra.mxu0 0
        %343 = vmatprep.subr.bf16.mxu0 0
        %344 = vmatpush1.bf16.msra.mxu0 0
        %345 = vmatprep.subr.bf16.mxu0 0
        %346 = vmatpush1.bf16.msra.mxu0 0
        %347 = vmatprep.mubr.bf16.mxu0 0
        %348 = vmatmul.mubr.bf16.gmra.mrb[0].mxu0 %v306
        %v349 = vpop.f32.mrb[0].mxu0
        %v350 = vadd.f32 0.0, %v349
        %v351 = vpop.f32.mrb[0].mxu0
        %v352 = vadd.f32 0.0, %v351
        %v353 = vpop.f32.mrb[0].mxu0
        %v354 = vpop.f32.mrb[0].mxu0
        %355 = vdwg.mxu0
        %356 = vst [vmem:[%s262] sm:$0xff] %v350
        %357 = vst [vmem:[%s262 + $0x8] sm:$0xff] %v352
        %v358 = vadd.f32 %v350, %v352
        %359 = vadd.xlane.f32.xlu0 %v358
        %v360 = vpop.xlane.xlu0 %359
        %vm361 = vcmask 7168
        %362 = vst.msk [vmem:[%s267] sm:$0xff] %vm361, %v360
        %v363 = vmul.f32 %v350, %v350
        %v364 = vmul.f32 %v352, %v352
        %v365 = vadd.f32 %v363, %v364
        %366 = vadd.xlane.f32.xlu0 %v365
        %v367 = vpop.xlane.xlu0 %366
        %368 = vst.msk [vmem:[%s271] sm:$0xff] %vm361, %v367
        %s369 = smul.u32 2, %s16
        %p370 = scmp.lt.s32.totalorder %s369, 3
        %s371 = scalar_select %p370, %s369, 3
        %s372 = smul.addr %s371, 8
        %s373 = scalar_lea.vmem %s2, %s372
        %p374 = scmp.lt.s32.totalorder %s16, 1
        %s375 = scalar_select %p374, %s16, 1
        %s376 = smul.addr %s375, 8
        %s377 = scalar_lea.vmem %s3, %s376
        %p378 = scmp.lt.s32.totalorder %s16, 1
        %s379 = scalar_select %p378, %s16, 1
        %s380 = smul.addr %s379, 8
        %s381 = scalar_lea.vmem %s4, %s380
        // Predicated region
        $region67: #{convolution_forward.2} parent=61 // pred_check
          %p382 = pneg %p81
        $region68: #{convolution_forward.2} parent=61 // pred_check_branch
          %384 = sbr.rel (%p382) target = $region70
        $region69: #{convolution_forward.2} parent=61 // pred_region
          %s385 = smul.u32 2, %s16
        $region70: #{convolution_forward.2} parent=61 // pred_fallthru
          _
        // Predicated region
        $region71: #{convolution_forward.2} parent=61 // pred_check
          %p386 = pneg %p107
        $region72: #{convolution_forward.2} parent=61 // pred_check_branch
          %388 = sbr.rel (%p386) target = $region74
        $region73: #{convolution_forward.2} parent=61 // pred_region
          _
        $region74: #{convolution_forward.2} parent=61 // pred_fallthru
          _
        // Predicated region
        $region75: #{convolution_forward.2} parent=61 // pred_check
          %p389 = pneg %p133
        $region76: #{convolution_forward.2} parent=61 // pred_check_branch
          %391 = sbr.rel (%p389) target = $region78
        $region77: #{convolution_forward.2} parent=61 // pred_region
          _
        $region78: #{convolution_forward.2} parent=61 // pred_fallthru
          _
      $region62: #{convolution_forward.2} parent=5 // pred_fallthru
        _
      %p392 = scmp.le.s32.totalorder 2, %s11
      // Predicated region
      $region79: #{convolution_forward.2} parent=5 // pred_check
        %p393 = pneg %p392
      $region80: #{convolution_forward.2} parent=5 // pred_check_branch
        %395 = sbr.rel (%p393) target = $region82
      $region81: #{convolution_forward.2} parent=5 // pred_region
        %s396 = ssub.s32 %s11, 2
        // Predicated region
        $region83: #{convolution_forward.2} parent=81 // pred_check
          %p397 = pneg %p87
        $region84: #{convolution_forward.2} parent=81 // pred_check_branch
          %399 = sbr.rel (%p397) target = $region86
        $region85: #{convolution_forward.2} parent=81 // pred_region
          %s400 = smul.u32 2, %s17
          %p401 = scmp.lt.s32.totalorder %s400, 3
          %s402 = scalar_select %p401, %s400, 3
          %s403 = smul.addr %s402, 8
          %s404 = scalar_lea.vmem %s2, %s403
        $region86: #{convolution_forward.2} parent=81 // pred_fallthru
          _
        // Predicated region
        $region87: #{convolution_forward.2} parent=81 // pred_check
          %p405 = pneg %p113
        $region88: #{convolution_forward.2} parent=81 // pred_check_branch
          %407 = sbr.rel (%p405) target = $region90
        $region89: #{convolution_forward.2} parent=81 // pred_region
          %p408 = scmp.lt.s32.totalorder %s17, 1
          %s409 = scalar_select %p408, %s17, 1
          %s410 = smul.addr %s409, 8
          %s411 = scalar_lea.vmem %s3, %s410
        $region90: #{convolution_forward.2} parent=81 // pred_fallthru
          _
        // Predicated region
        $region91: #{convolution_forward.2} parent=81 // pred_check
          %p412 = pneg %p139
        $region92: #{convolution_forward.2} parent=81 // pred_check_branch
          %414 = sbr.rel (%p412) target = $region94
        $region93: #{convolution_forward.2} parent=81 // pred_region
          %p415 = scmp.lt.s32.totalorder %s17, 1
          %s416 = scalar_select %p415, %s17, 1
          %s417 = smul.addr %s416, 8
          %s418 = scalar_lea.vmem %s4, %s417
        $region94: #{convolution_forward.2} parent=81 // pred_fallthru
          _
      $region82: #{convolution_forward.2} parent=5 // pred_fallthru
        _
    $region6: #{convolution_forward.2} parent=1 // loop_footer
      %s15 = sadd.s32 1, %s11
    $region7: #{convolution_forward.2} parent=1 // loop_footer_branch
      %10 = sbr.rel target = $region3
    $region8: #{convolution_forward.2} parent=1 // loop_exit
      _

</llo_original>
